<compile_context>
chip_gen: v6e
topology: v6e:2x2x1
jax: 0.10.0
libtpu: 0.0.40
codegen_flags: <defaults>
</compile_context>

<pallas_src>
import functools

import jax
import jax.numpy as jnp
from jax.experimental import pallas as pl
from jax.experimental.pallas import tpu as pltpu


_LANES = 128                  # packed layer-2 / output lane width
_LOGIT_BASE = 64              # lanes [64:64+A) carry the raw actor logits
_VALUE_LANE = _LANES - 1      # lane 127 carries the critic value
_MAX_TB = 1024                # max batch-tile rows (VMEM-safe on v5e/v6e/v7x)


def _actor_critic_kernel(x_ref, w1_ref, b1_ref, w2_ref, b2_ref, out_ref, *, n_actions):
    # x_ref  : (TB, Dpad)  f32  feature rows (zero-padded rows/cols)
    # w1_ref : (Dpad, 2H)  bf16 [w1a | w1c]
    # b1_ref : (1, 2H)     f32  [b1a | b1c]
    # w2_ref : (2H, 128)   bf16 block-diag, lane-packed:
    #                      cols [0:A) and [64:64+A) = w2a (duplicated), col 127 = w2c
    # b2_ref : (1, 128)    f32  matching bias layout
    # out_ref: (TB, 128)   f32  lanes [0:A)=proba, [64:64+A)=logits, lane 127=value
    x = x_ref[...].astype(jnp.bfloat16)
    h = jnp.tanh(jnp.dot(x, w1_ref[...], preferred_element_type=jnp.float32)
                 + b1_ref[...])                                               # (TB, 2H) f32
    y = (jnp.dot(h.astype(jnp.bfloat16), w2_ref[...],
                 preferred_element_type=jnp.float32)
         + b2_ref[...])                                                        # (TB, 128) f32

    # masked softmax over the first n_actions lanes (padded lanes -> -inf -> exp == 0)
    lane = jax.lax.broadcasted_iota(jnp.int32, y.shape, 1)
    logits = jnp.where(lane < n_actions, y, -jnp.inf)
    m = jnp.max(logits, axis=-1, keepdims=True)
    e = jnp.exp(logits - m)
    s = jnp.sum(e, axis=-1, keepdims=True)
    r = pl.reciprocal(s, approx=True)          # EUP slot (shares slack with exp/tanh)
    r = r * (2.0 - s * r)                      # one Newton step -> ~f32 accuracy (VPU is free)
    proba = e * r                              # (TB, 128); zeros outside [0:A)

    # single lane-dense store: proba in [0:A), raw logits in [64:64+A), value in lane 127
    out_ref[...] = jnp.where(lane < n_actions, proba, y)


@functools.partial(jax.jit, static_argnames=("n_actions",))
def actor_critic_batched(features, packed, n_actions):
    """features: (B, D) float32.  Returns (logits (B,A), proba (B,A), value (B,))."""
    b, d = features.shape
    d_pad, two_h = packed["w1"].shape

    # batch padding / tiling
    b_pad = ((b + 7) // 8) * 8                 # vreg sublane multiple
    tb = min(b_pad, _MAX_TB)
    if tb == b_pad and b_pad >= 16:
        tb = ((b_pad // 2 + 7) // 8) * 8       # >= 2 grid steps -> megacore sharding on v7x
    b_pad = ((b_pad + tb - 1) // tb) * tb

    # single pad op (rows + feature cols); padded rows just compute the net at x = 0
    x = jnp.pad(features.astype(jnp.float32), ((0, b_pad - b), (0, d_pad - d)))

    out = pl.pallas_call(
        functools.partial(_actor_critic_kernel, n_actions=n_actions),
        out_shape=jax.ShapeDtypeStruct((b_pad, _LANES), jnp.float32),
        grid=(b_pad // tb,),
        in_specs=[
            pl.BlockSpec((tb, d_pad), lambda i: (i, 0)),
            pl.BlockSpec((d_pad, two_h), lambda i: (0, 0)),   # resident across grid
            pl.BlockSpec((1, two_h), lambda i: (0, 0)),       # resident across grid
            pl.BlockSpec((two_h, _LANES), lambda i: (0, 0)),  # resident across grid
            pl.BlockSpec((1, _LANES), lambda i: (0, 0)),      # resident across grid
        ],
        out_specs=pl.BlockSpec((tb, _LANES), lambda i: (i, 0)),
        compiler_params=pltpu.CompilerParams(dimension_semantics=("parallel",)),
    )(x, packed["w1"], packed["b1"], packed["w2"], packed["b2"])

    proba = out[:b, 0:n_actions]
    logits = out[:b, _LOGIT_BASE:_LOGIT_BASE + n_actions]
    value = out[:b, _VALUE_LANE]
    return logits, proba, value


def pack_params(params, n_actions):
    """One-time packing of the 8 PyTorch-style Linear tensors into 4 fused arrays."""
    d, h = params["w1a"].shape
    assert 1 <= n_actions <= _LOGIT_BASE - 1, \
        "need proba lanes, duplicated logit lanes and the value lane to fit in 128 lanes"
    d_pad = ((d + 7) // 8) * 8

    # layer 1: [w1a | w1c], zero-padded contraction rows; bias as a separate (1, 2H) array
    w1 = jnp.zeros((d_pad, 2 * h), jnp.float32)
    w1 = w1.at[:d, :h].set(params["w1a"])
    w1 = w1.at[:d, h:].set(params["w1c"])
    b1 = jnp.concatenate([params["b1a"], params["b1c"]], axis=1)          # (1, 2H)

    # layer 2: block-diagonal, lane-packed; actor cols duplicated at [0:A) (softmax source)
    # and [64:64+A) (raw logits for sampling); critic at lane 127.
    w2 = jnp.zeros((2 * h, _LANES), jnp.float32)
    w2 = w2.at[:h, 0:n_actions].set(params["w2a"])
    w2 = w2.at[:h, _LOGIT_BASE:_LOGIT_BASE + n_actions].set(params["w2a"])
    w2 = w2.at[h:, _VALUE_LANE:_VALUE_LANE + 1].set(params["w2c"])
    b2 = jnp.zeros((1, _LANES), jnp.float32)
    b2 = b2.at[:, 0:n_actions].set(params["b2a"])
    b2 = b2.at[:, _LOGIT_BASE:_LOGIT_BASE + n_actions].set(params["b2a"])
    b2 = b2.at[:, _VALUE_LANE:_VALUE_LANE + 1].set(params["b2c"])

    # bf16 MXU operands (halves resident weight DMA); biases stay f32 for the VPU adds.
    return {"w1": w1.astype(jnp.bfloat16), "b1": b1,
            "w2": w2.astype(jnp.bfloat16), "b2": b2}


def init_params(key, d, h, a):
    """Deterministic synthetic init (PyTorch-Linear-like uniform ranges)."""
    ks = jax.random.split(key, 8)

    def lin(kw, kb, fan_in, fan_out):
        bound = 1.0 / jnp.sqrt(jnp.float32(fan_in))
        w = jax.random.uniform(kw, (fan_in, fan_out), jnp.float32, -bound, bound)
        b = jax.random.uniform(kb, (1, fan_out), jnp.float32, -bound, bound)
        return w, b

    w1a, b1a = lin(ks[0], ks[1], d, h)
    w2a, b2a = lin(ks[2], ks[3], h, a)
    w1c, b1c = lin(ks[4], ks[5], d, h)
    w2c, b2c = lin(ks[6], ks[7], h, 1)
    return dict(w1a=w1a, b1a=b1a, w2a=w2a, b2a=b2a,
                w1c=w1c, b1c=b1c, w2c=w2c, b2c=b2c)


def forward(features, packed, n_actions, train=True, key=None):
    """Full ActorCritic.forward for a single state: (action, proba[action], value).

    Note: at B=1 this is dispatch-overhead bound; batch env states through
    `actor_critic_batched` whenever possible.
    """
    logits, proba, value = actor_critic_batched(features.reshape(1, -1), packed, n_actions)
    logits, proba, value = logits[0], proba[0], value[0]
    if train:
        # TODO(synk): original uses host-side np.random.choice(p=proba); we sample the same
        # categorical distribution from the raw logits with JAX PRNG (different RNG stream).
        action = jax.random.categorical(key, logits)
    else:
        action = jnp.argmax(proba)
    return action, proba[action], value


def _reference(x, p):
    """Pure-JAX reference on the original (unpacked) parameters."""
    h_a = jnp.tanh(x @ p["w1a"] + p["b1a"])
    logits = h_a @ p["w2a"] + p["b2a"]
    proba = jax.nn.softmax(logits, axis=-1)
    h_c = jnp.tanh(x @ p["w1c"] + p["b1c"])
    value = (h_c @ p["w2c"] + p["b2c"])[:, 0]
    return logits, proba, value


if __name__ == "__main__":
    # CartPole-like setup: feature dim 4, hidden [128], 2 actions.
    D, H, A = 4, 128, 2

    root = jax.random.PRNGKey(0)
    k_feat, k_feat2, k_params, k_sample = jax.random.split(root, 4)

    params = init_params(k_params, D, H, A)
    packed = pack_params(params, A)

    # bf16 MXU operands -> looser tolerance than the pure-f32 path.
    TOL = 2e-2

    # Small batch (grid = 1 step).
    feats_small = jax.random.normal(k_feat, (8, D), jnp.float32)
    lk, pk, vk = actor_critic_batched(feats_small, packed, A)
    jax.block_until_ready((lk, pk, vk))
    lr, pr, vr = _reference(feats_small, params)
    assert jnp.allclose(lk, lr, atol=TOL), (lk, lr)
    assert jnp.allclose(pk, pr, atol=TOL), (pk, pr)
    assert jnp.allclose(vk, vr, atol=TOL), (vk, vr)

    # Larger, non-multiple batch -> exercises row padding and a 2-step parallel grid.
    feats_big = jax.random.normal(k_feat2, (300, D), jnp.float32)
    lk2, pk2, vk2 = actor_critic_batched(feats_big, packed, A)
    jax.block_until_ready((lk2, pk2, vk2))
    lr2, pr2, vr2 = _reference(feats_big, params)
    assert jnp.allclose(lk2, lr2, atol=TOL)
    assert jnp.allclose(pk2, pr2, atol=TOL)
    assert jnp.allclose(vk2, vr2, atol=TOL)

    # Single-state forward matching the module's (action, proba[action], value) contract.
    features = feats_small[0]
    action, p_action, value = forward(features, packed, A, train=True, key=k_sample)
    jax.block_until_ready((action, p_action, value))

    action_e, p_e, value_e = forward(features, packed, A, train=False)
    jax.block_until_ready((action_e, p_e, value_e))

    print("KERNEL_OK")
</pallas_src>

<mosaic_0001>
module attributes {stable_mosaic.version = 11 : i64} {
  func.func @_actor_critic_kernel(%arg0: i32, %arg1: memref<8x8xf32, #tpu.memory_space<vmem>>, %arg2: memref<8x256xbf16, #tpu.memory_space<vmem>>, %arg3: memref<1x256xf32, #tpu.memory_space<vmem>>, %arg4: memref<256x128xbf16, #tpu.memory_space<vmem>>, %arg5: memref<1x128xf32, #tpu.memory_space<vmem>>, %arg6: memref<8x128xf32, #tpu.memory_space<vmem>>) attributes {dimension_semantics = [#tpu.dimension_semantics<parallel>], iteration_bounds = array<i64: 1>, scalar_prefetch = 0 : i64, scratch_operands = 0 : i64, tpu.core_type = #tpu.core_type<tc>, window_params = [{transform_indices = @transform_0, window_bounds = array<i64: 8, 8>}, {pipeline_mode = #tpu.pipeline_mode<synchronous>, transform_indices = @transform_1, window_bounds = array<i64: 8, 256>}, {pipeline_mode = #tpu.pipeline_mode<synchronous>, transform_indices = @transform_2, window_bounds = array<i64: 1, 256>}, {pipeline_mode = #tpu.pipeline_mode<synchronous>, transform_indices = @transform_3, window_bounds = array<i64: 256, 128>}, {pipeline_mode = #tpu.pipeline_mode<synchronous>, transform_indices = @transform_4, window_bounds = array<i64: 1, 128>}, {transform_indices = @transform_5, window_bounds = array<i64: 8, 128>}]} {
    %c0 = arith.constant 0 : index
    %c0_0 = arith.constant 0 : index
    %0 = vector.load %arg1[%c0, %c0_0] : memref<8x8xf32, #tpu.memory_space<vmem>>, vector<8x8xf32>
    %1 = arith.truncf %0 : vector<8x8xf32> to vector<8x8xbf16>
    %c0_1 = arith.constant 0 : index
    %c0_2 = arith.constant 0 : index
    %2 = vector.load %arg2[%c0_1, %c0_2] : memref<8x256xbf16, #tpu.memory_space<vmem>>, vector<8x256xbf16>
    %cst = arith.constant dense<0.000000e+00> : vector<8x256xf32>
    %3 = tpu.matmul %1, %2, %cst {dimension_numbers = #tpu.dot_dimension_numbers<[1], [0], [0], [1], [0, 0, 1, 1], [], []>} : vector<8x8xbf16>, vector<8x256xbf16>, vector<8x256xf32> -> vector<8x256xf32>
    %c0_3 = arith.constant 0 : index
    %c0_4 = arith.constant 0 : index
    %4 = vector.load %arg3[%c0_3, %c0_4] : memref<1x256xf32, #tpu.memory_space<vmem>>, vector<1x256xf32>
    %5 = vector.broadcast %4 : vector<1x256xf32> to vector<8x256xf32>
    %6 = arith.addf %3, %5 : vector<8x256xf32>
    %7 = math.tanh %6 : vector<8x256xf32>
    %8 = arith.truncf %7 : vector<8x256xf32> to vector<8x256xbf16>
    %c0_5 = arith.constant 0 : index
    %c0_6 = arith.constant 0 : index
    %9 = vector.load %arg4[%c0_5, %c0_6] : memref<256x128xbf16, #tpu.memory_space<vmem>>, vector<256x128xbf16>
    %cst_7 = arith.constant dense<0.000000e+00> : vector<8x128xf32>
    %10 = tpu.matmul %8, %9, %cst_7 {dimension_numbers = #tpu.dot_dimension_numbers<[1], [0], [0], [1], [0, 0, 1, 1], [], []>} : vector<8x256xbf16>, vector<256x128xbf16>, vector<8x128xf32> -> vector<8x128xf32>
    %c0_8 = arith.constant 0 : index
    %c0_9 = arith.constant 0 : index
    %11 = vector.load %arg5[%c0_8, %c0_9] : memref<1x128xf32, #tpu.memory_space<vmem>>, vector<1x128xf32>
    %12 = vector.broadcast %11 : vector<1x128xf32> to vector<8x128xf32>
    %13 = arith.addf %10, %12 : vector<8x128xf32>
    %14 = tpu.iota {dimensions = array<i32: 1>} : vector<8x128xi32>
    %c2_i32 = arith.constant 2 : i32
    %15 = vector.broadcast %c2_i32 : i32 to vector<8x128xi32>
    %16 = arith.cmpi slt, %14, %15 : vector<8x128xi32>
    %cst_10 = arith.constant 0xFF800000 : f32
    %17 = vector.broadcast %cst_10 : f32 to vector<8x128xf32>
    %18 = arith.select %16, %13, %17 : vector<8x128xi1>, vector<8x128xf32>
    %cst_11 = arith.constant dense<0xFF800000> : vector<8xf32>
    %19 = vector.multi_reduction <maximumf>, %18, %cst_11 [1] : vector<8x128xf32> to vector<8xf32>
    %20 = vector.shape_cast %19 : vector<8xf32> to vector<8x1xf32>
    %21 = vector.broadcast %20 : vector<8x1xf32> to vector<8x128xf32>
    %22 = arith.subf %18, %21 : vector<8x128xf32>
    %23 = math.exp %22 : vector<8x128xf32>
    %cst_12 = arith.constant dense<0.000000e+00> : vector<8xf32>
    %24 = vector.multi_reduction <add>, %23, %cst_12 [1] : vector<8x128xf32> to vector<8xf32>
    %25 = vector.shape_cast %24 : vector<8xf32> to vector<8x1xf32>
    %26 = tpu.reciprocal %25 {approx = true} : vector<8x1xf32> -> vector<8x1xf32>
    %27 = arith.mulf %25, %26 : vector<8x1xf32>
    %cst_13 = arith.constant 2.000000e+00 : f32
    %28 = vector.broadcast %cst_13 : f32 to vector<8x1xf32>
    %29 = arith.subf %28, %27 : vector<8x1xf32>
    %30 = arith.mulf %26, %29 : vector<8x1xf32>
    %31 = vector.broadcast %30 : vector<8x1xf32> to vector<8x128xf32>
    %32 = arith.mulf %23, %31 : vector<8x128xf32>
    %c2_i32_14 = arith.constant 2 : i32
    %33 = vector.broadcast %c2_i32_14 : i32 to vector<8x128xi32>
    %34 = arith.cmpi slt, %14, %33 : vector<8x128xi32>
    %35 = arith.select %34, %32, %13 : vector<8x128xi1>, vector<8x128xf32>
    %c0_15 = arith.constant 0 : index
    %c0_16 = arith.constant 0 : index
    %36 = vector.load %arg6[%c0_15, %c0_16] : memref<8x128xf32, #tpu.memory_space<vmem>>, vector<8x128xf32>
    tpu.vector_store %arg6[%c0_15, %c0_16], %35 {strides = array<i32>} : memref<8x128xf32, #tpu.memory_space<vmem>>, vector<8x128xf32>,
    return
  }
  func.func @transform_0(%arg0: i32) -> (i32, i32) {
    %c0_i32 = arith.constant 0 : i32
    %c0_i32_0 = arith.constant 0 : i32
    return %arg0, %c0_i32 : i32, i32
  }
  func.func @transform_1(%arg0: i32) -> (i32, i32) {
    %c0_i32 = arith.constant 0 : i32
    %c0_i32_0 = arith.constant 0 : i32
    %c0_i32_1 = arith.constant 0 : i32
    return %c0_i32, %c0_i32_0 : i32, i32
  }
  func.func @transform_2(%arg0: i32) -> (i32, i32) {
    %c0_i32 = arith.constant 0 : i32
    %c0_i32_0 = arith.constant 0 : i32
    %c0_i32_1 = arith.constant 0 : i32
    return %c0_i32, %c0_i32_0 : i32, i32
  }
  func.func @transform_3(%arg0: i32) -> (i32, i32) {
    %c0_i32 = arith.constant 0 : i32
    %c0_i32_0 = arith.constant 0 : i32
    %c0_i32_1 = arith.constant 0 : i32
    return %c0_i32, %c0_i32_0 : i32, i32
  }
  func.func @transform_4(%arg0: i32) -> (i32, i32) {
    %c0_i32 = arith.constant 0 : i32
    %c0_i32_0 = arith.constant 0 : i32
    %c0_i32_1 = arith.constant 0 : i32
    return %c0_i32, %c0_i32_0 : i32, i32
  }
  func.func @transform_5(%arg0: i32) -> (i32, i32) {
    %c0_i32 = arith.constant 0 : i32
    %c0_i32_0 = arith.constant 0 : i32
    return %arg0, %c0_i32 : i32, i32
  }
}

</mosaic_0001>

<llo_original>
// kernel: actor_critic_batched.1
$region0: #{actor_critic_batched.1}
  #allocation0 [shape = 'u32[]', space=smem, size = 0x4, offset = 0x4, fixed_abs, tag = 'smem constant byte address 0x4 - core index']
  #allocation1 [shape = 'u32[144,128]{1,0:T(1,128)}', space=vmem, size = 0x12000, scoped, tag = 'internal scratch']
  %s0 = inlined_call_operand.vmem [shape: f32[8,8], index: 0, kind: input, shape index: {}]
  %s1 = inlined_call_operand.vmem [shape: bf16[8,256], index: 1, kind: input, shape index: {}]
  %s2 = inlined_call_operand.vmem [shape: f32[1,256], index: 2, kind: input, shape index: {}]
  %s3 = inlined_call_operand.hbm [shape: bf16[256,128], index: 3, kind: input, shape index: {}]
  %s4 = inlined_call_operand.vmem [shape: f32[1,128], index: 4, kind: input, shape index: {}]
  %s5 = inlined_call_operand.vmem [shape: f32[8,128], index: 5, kind: output, shape index: {}]
  %s6 = sld [smem:[#allocation0]]
  $region34: #{actor_critic_batched.1} parent=0
    _
  %s8 = ssub.s32 1, %s6
  %s9 = scalar_select 0, %s8, %s6
  $region1: #{actor_critic_batched.1} parent=0
    #allocation2 [shape = 'u8[65536]{0}', space=vmem, size = 0x10000, scoped, tag = 'input window, operand 3, single buffered']
    #allocation3 [shape = 's32[1]{0}', space=sflag, size = 0x4, scoped, tag = 'scoped memory for actor_critic_batched.1']
    %10 = vsyncpa [#allocation3], 0
    // Predicated region
    $region2: #{actor_critic_batched.1} parent=1 // pred_check
      _
    $region3: #{actor_critic_batched.1} parent=1 // pred_check_branch
      %12 = sbr.rel (0) target = $region5
    $region4: #{actor_critic_batched.1} parent=1 // pred_region
      _
    $region5: #{actor_critic_batched.1} parent=1 // pred_fallthru
      _
    // Predicated region
    $region6: #{actor_critic_batched.1} parent=1 // pred_check
      _
    $region7: #{actor_critic_batched.1} parent=1 // pred_check_branch
      %14 = sbr.rel (0) target = $region9
    $region8: #{actor_critic_batched.1} parent=1 // pred_region
      _
    $region9: #{actor_critic_batched.1} parent=1 // pred_fallthru
      _
    // Predicated region
    $region10: #{actor_critic_batched.1} parent=1 // pred_check
      _
    $region11: #{actor_critic_batched.1} parent=1 // pred_check_branch
      %16 = sbr.rel (0) target = $region13
    $region12: #{actor_critic_batched.1} parent=1 // pred_region
      _
    $region13: #{actor_critic_batched.1} parent=1 // pred_fallthru
      _
    // Predicated region
    $region14: #{actor_critic_batched.1} parent=1 // pred_check
      _
    $region15: #{actor_critic_batched.1} parent=1 // pred_check_branch
      %18 = sbr.rel (0) target = $region17
    $region16: #{actor_critic_batched.1} parent=1 // pred_region
      %s20 = ssub.s32 2048, 2048
      %21 = vsyncadd [#allocation3], %s20
      %s22 = sshll.u32 [#allocation2], 4
      %s23 = int_to_ptr.vmem [resolvable:$true] %s22
      %28 = dma.hbm_to_vmem [thread:$0]  %s3, 2048, %s23, [#allocation3], 64, 64, 4
    $region17: #{actor_critic_batched.1} parent=1 // pred_fallthru
      _
    // Predicated region
    $region18: #{actor_critic_batched.1} parent=1 // pred_check
      _
    $region19: #{actor_critic_batched.1} parent=1 // pred_check_branch
      %30 = sbr.rel (0) target = $region21
    $region20: #{actor_critic_batched.1} parent=1 // pred_region
      _
    $region21: #{actor_critic_batched.1} parent=1 // pred_fallthru
      _
    // Predicated region
    $region22: #{actor_critic_batched.1} parent=1 // pred_check
      _
    $region23: #{actor_critic_batched.1} parent=1 // pred_check_branch
      %32 = sbr.rel (0) target = $region25
    $region24: #{actor_critic_batched.1} parent=1 // pred_region
      %33 = dma.done [#allocation3], 2048
    $region25: #{actor_critic_batched.1} parent=1 // pred_fallthru
      _
    %v35 = vld [vmem:[%s0] sm:$0xff]
    %v36 = vpack.c.bf16 %v35, %v35
    %v37 = vld [vmem:[%s1] sm:$0xff]
    %v38 = vld [vmem:[%s2] sm:$0x3]
    %v40 = vlaneseq
    %v41 = vshrl.u32 %v40, 7
    %v42 = vsub.s32 0, %v41
    %v43 = vrot.slane %v38, %v42
    %v44 = vlaneseq
    %v45 = vshrl.u32 %v44, 7
    %v46 = vsub.s32 1, %v45
    %v47 = vrot.slane %v38, %v46
    %v51 = vunpack.c.l.b16 %v37
    %v52 = vunpack.c.h.b16 %v37
    %v53 = vpack.c.b16 %v51, %v51
    %v54 = vpack.c.b16 %v52, %v52
    %vm55 = vcmask 64512
    %v57 = vsel %vm55, %v36, 0
    %vm59 = vcmask 1043456
    %v61 = vsel %vm59, %v53, 0
    %v64 = vsel %vm59, %v54, 0
    %66 = vmatprep.subr.bf16.mxu0 0
    %67 = vmatpush1.bf16.msra.mxu0 0
    %68 = vmatprep.subr.bf16.mxu0 0
    %69 = vmatpush1.bf16.msra.mxu0 0
    %70 = vmatprep.subr.bf16.mxu0 0
    %71 = vmatpush1.bf16.msra.mxu0 0
    %72 = vmatprep.subr.bf16.mxu0 0
    %73 = vmatpush1.bf16.msra.mxu0 0
    %74 = vmatprep.subr.bf16.mxu0 0
    %75 = vmatpush1.bf16.msra.mxu0 0
    %76 = vmatprep.subr.bf16.mxu0 0
    %77 = vmatpush1.bf16.msra.mxu0 0
    %78 = vmatprep.subr.bf16.mxu0 0
    %79 = vmatpush1.bf16.msra.mxu0 0
    %80 = vmatprep.subr.bf16.mxu0 %v64
    %81 = vmatpush1.bf16.msra.mxu0 %v61
    %82 = vmatprep.subr.bf16.mxu0 0
    %83 = vmatpush2.bf16.msra.mxu0 0
    %84 = vmatprep.subr.bf16.mxu0 0
    %85 = vmatpush2.bf16.msra.mxu0 0
    %86 = vmatprep.subr.bf16.mxu0 0
    %87 = vmatpush2.bf16.msra.mxu0 0
    %88 = vmatprep.subr.bf16.mxu0 0
    %89 = vmatpush2.bf16.msra.mxu0 0
    %90 = vmatprep.subr.bf16.mxu0 0
    %91 = vmatpush2.bf16.msra.mxu0 0
    %92 = vmatprep.subr.bf16.mxu0 0
    %93 = vmatpush2.bf16.msra.mxu0 0
    %94 = vmatprep.subr.bf16.mxu0 0
    %95 = vmatpush2.bf16.msra.mxu0 0
    %96 = vmatprep.subr.bf16.mxu0 0
    %97 = vmatpush2.bf16.msra.mxu0 0
    %98 = vmatprep.mubr.bf16.mxu0 0
    %99 = vmatmul.mubr.bf16.gmra.mxu0 %v57
    %v100 = vpop.f32.mrf.mxu0
    %v101 = vadd.f32 %v43, %v100
    %v102 = vpop.f32.mrf.mxu0
    %v103 = vadd.f32 %v47, %v102
    %v104 = vpop.f32.mrf.mxu0
    %v105 = vpop.f32.mrf.mxu0
    %106 = vdwg.mxu0
    %v107 = vtanh.pop %v101
    %v108 = vtanh.pop %v103
    %v109 = vpack.c.bf16 %v107, %v107
    %v110 = vpack.c.bf16 %v108, %v108
    %v111 = vld [vmem:[#allocation2] sm:$0xf]
    %v112 = vld [vmem:[#allocation2 + $0x4] sm:$0xf]
    %v113 = vld [vmem:[#allocation2 + $0x8] sm:$0xf]
    %v114 = vld [vmem:[#allocation2 + $0xc] sm:$0xf]
    %v115 = vld [vmem:[#allocation2 + $0x10] sm:$0xf]
    %v116 = vld [vmem:[#allocation2 + $0x14] sm:$0xf]
    %v117 = vld [vmem:[#allocation2 + $0x18] sm:$0xf]
    %v118 = vld [vmem:[#allocation2 + $0x1c] sm:$0xf]
    %v119 = vld [vmem:[#allocation2 + $0x20] sm:$0xf]
    %v120 = vld [vmem:[#allocation2 + $0x24] sm:$0xf]
    %v121 = vld [vmem:[#allocation2 + $0x28] sm:$0xf]
    %v122 = vld [vmem:[#allocation2 + $0x2c] sm:$0xf]
    %v123 = vld [vmem:[#allocation2 + $0x30] sm:$0xf]
    %v124 = vld [vmem:[#allocation2 + $0x34] sm:$0xf]
    %v125 = vld [vmem:[#allocation2 + $0x38] sm:$0xf]
    %v126 = vld [vmem:[#allocation2 + $0x3c] sm:$0xf]
    %v127 = vld [vmem:[#allocation2 + $0x40] sm:$0xf]
    %v128 = vld [vmem:[#allocation2 + $0x44] sm:$0xf]
    %v129 = vld [vmem:[#allocation2 + $0x48] sm:$0xf]
    %v130 = vld [vmem:[#allocation2 + $0x4c] sm:$0xf]
    %v131 = vld [vmem:[#allocation2 + $0x50] sm:$0xf]
    %v132 = vld [vmem:[#allocation2 + $0x54] sm:$0xf]
    %v133 = vld [vmem:[#allocation2 + $0x58] sm:$0xf]
    %v134 = vld [vmem:[#allocation2 + $0x5c] sm:$0xf]
    %v135 = vld [vmem:[#allocation2 + $0x60] sm:$0xf]
    %v136 = vld [vmem:[#allocation2 + $0x64] sm:$0xf]
    %v137 = vld [vmem:[#allocation2 + $0x68] sm:$0xf]
    %v138 = vld [vmem:[#allocation2 + $0x6c] sm:$0xf]
    %v139 = vld [vmem:[#allocation2 + $0x70] sm:$0xf]
    %v140 = vld [vmem:[#allocation2 + $0x74] sm:$0xf]
    %v141 = vld [vmem:[#allocation2 + $0x78] sm:$0xf]
    %v142 = vld [vmem:[#allocation2 + $0x7c] sm:$0xf]
    %v143 = vld [vmem:[%s4] sm:$0x1]
    %v145 = vlaneseq
    %v146 = vshrl.u32 %v145, 7
    %v147 = vsub.s32 0, %v146
    %v148 = vrot.slane %v143, %v147
    %v182 = vunpack.c.l.b16 %v111
    %v183 = vunpack.c.l.b16 %v112
    %v184 = vunpack.c.l.b16 %v113
    %v185 = vunpack.c.l.b16 %v114
    %v186 = vunpack.c.l.b16 %v115
    %v187 = vunpack.c.l.b16 %v116
    %v188 = vunpack.c.l.b16 %v117
    %v189 = vunpack.c.l.b16 %v118
    %v190 = vunpack.c.l.b16 %v119
    %v191 = vunpack.c.l.b16 %v120
    %v192 = vunpack.c.l.b16 %v121
    %v193 = vunpack.c.l.b16 %v122
    %v194 = vunpack.c.l.b16 %v123
    %v195 = vunpack.c.l.b16 %v124
    %v196 = vunpack.c.l.b16 %v125
    %v197 = vunpack.c.l.b16 %v126
    %v198 = vunpack.c.l.b16 %v127
    %v199 = vunpack.c.l.b16 %v128
    %v200 = vunpack.c.l.b16 %v129
    %v201 = vunpack.c.l.b16 %v130
    %v202 = vunpack.c.l.b16 %v131
    %v203 = vunpack.c.l.b16 %v132
    %v204 = vunpack.c.l.b16 %v133
    %v205 = vunpack.c.l.b16 %v134
    %v206 = vunpack.c.l.b16 %v135
    %v207 = vunpack.c.l.b16 %v136
    %v208 = vunpack.c.l.b16 %v137
    %v209 = vunpack.c.l.b16 %v138
    %v210 = vunpack.c.l.b16 %v139
    %v211 = vunpack.c.l.b16 %v140
    %v212 = vunpack.c.l.b16 %v141
    %v213 = vunpack.c.l.b16 %v142
    %v214 = vpack.c.b16 %v183, %v182
    %v215 = vpack.c.b16 %v185, %v184
    %v216 = vpack.c.b16 %v187, %v186
    %v217 = vpack.c.b16 %v189, %v188
    %v218 = vpack.c.b16 %v191, %v190
    %v219 = vpack.c.b16 %v193, %v192
    %v220 = vpack.c.b16 %v195, %v194
    %v221 = vpack.c.b16 %v197, %v196
    %v222 = vpack.c.b16 %v199, %v198
    %v223 = vpack.c.b16 %v201, %v200
    %v224 = vpack.c.b16 %v203, %v202
    %v225 = vpack.c.b16 %v205, %v204
    %v226 = vpack.c.b16 %v207, %v206
    %v227 = vpack.c.b16 %v209, %v208
    %v228 = vpack.c.b16 %v211, %v210
    %v229 = vpack.c.b16 %v213, %v212
    %246 = vmatprep.subr.bf16.mxu0 0
    %247 = vmatpush1.bf16.msra.mxu0 %v221
    %248 = vmatprep.subr.bf16.mxu0 0
    %249 = vmatpush1.bf16.msra.mxu0 %v220
    %250 = vmatprep.subr.bf16.mxu0 0
    %251 = vmatpush1.bf16.msra.mxu0 %v219
    %252 = vmatprep.subr.bf16.mxu0 0
    %253 = vmatpush1.bf16.msra.mxu0 %v218
    %254 = vmatprep.subr.bf16.mxu0 0
    %255 = vmatpush1.bf16.msra.mxu0 %v217
    %256 = vmatprep.subr.bf16.mxu0 0
    %257 = vmatpush1.bf16.msra.mxu0 %v216
    %258 = vmatprep.subr.bf16.mxu0 0
    %259 = vmatpush1.bf16.msra.mxu0 %v215
    %260 = vmatprep.subr.bf16.mxu0 0
    %261 = vmatpush1.bf16.msra.mxu0 %v214
    %262 = vmatprep.subr.bf16.mxu0 0
    %263 = vmatpush2.bf16.msra.mxu0 %v229
    %264 = vmatprep.subr.bf16.mxu0 0
    %265 = vmatpush2.bf16.msra.mxu0 %v228
    %266 = vmatprep.subr.bf16.mxu0 0
    %267 = vmatpush2.bf16.msra.mxu0 %v227
    %268 = vmatprep.subr.bf16.mxu0 0
    %269 = vmatpush2.bf16.msra.mxu0 %v226
    %270 = vmatprep.subr.bf16.mxu0 0
    %271 = vmatpush2.bf16.msra.mxu0 %v225
    %272 = vmatprep.subr.bf16.mxu0 0
    %273 = vmatpush2.bf16.msra.mxu0 %v224
    %274 = vmatprep.subr.bf16.mxu0 0
    %275 = vmatpush2.bf16.msra.mxu0 %v223
    %276 = vmatprep.subr.bf16.mxu0 0
    %277 = vmatpush2.bf16.msra.mxu0 %v222
    %278 = vmatprep.mubr.bf16.mxu0 %v110
    %279 = vmatmul.mubr.bf16.gmra.mxu0 %v109
    %v280 = vpop.f32.mrf.mxu0
    %v281 = vadd.f32 %v148, %v280
    %v282 = vpop.f32.mrf.mxu0
    %v283 = vpop.f32.mrf.mxu0
    %v284 = vpop.f32.mrf.mxu0
    %285 = vdwg.mxu0
    %v286 = vlaneseq
    %v287 = vand.u32 %v286, 127
    %vm288 = vcmp.lt.s32.totalorder %v287, 2
    %v289 = vsel %vm288, %v281, -inf
    %290 = vmax.xlane.f32.xlu0 %v289
    %v291 = vpop.xlane.xlu0 %290
    %v292 = vsub.f32 %v289, %v291
    %v293 = vmul.f32 %v292, 1.442695
    %v294 = vpow.pop %v293
    %295 = vadd.xlane.f32.xlu0 %v294
    %v296 = vpop.xlane.xlu0 %295
    %v297 = vrcp.pop %v296
    %v298 = vmul.f32 %v296, %v297
    %v299 = vsub.f32 2.0, %v298
    %v300 = vmul.f32 %v297, %v299
    %v301 = vmul.f32 %v294, %v300
    %v302 = vsel %vm288, %v301, %v281
    %303 = vst [vmem:[%s5] sm:$0xff] %v302
    // Predicated region
    $region26: #{actor_critic_batched.1} parent=1 // pred_check
      _
    $region27: #{actor_critic_batched.1} parent=1 // pred_check_branch
      %305 = sbr.rel (0) target = $region29
    $region28: #{actor_critic_batched.1} parent=1 // pred_region
      _
    $region29: #{actor_critic_batched.1} parent=1 // pred_fallthru
      _
    // Predicated region
    $region30: #{actor_critic_batched.1} parent=1 // pred_check
      _
    $region31: #{actor_critic_batched.1} parent=1 // pred_check_branch
      %307 = sbr.rel (0) target = $region33
    $region32: #{actor_critic_batched.1} parent=1 // pred_region
      _
    $region33: #{actor_critic_batched.1} parent=1 // pred_fallthru
      _
    %308 = vsyncpa [#allocation3], 1

</llo_original>
